<compile_context>
chip_gen: v7x
topology: tpu7x:2x2x1
jax: 0.10.0
libtpu: 0.0.40
codegen_flags: <defaults>
</compile_context>

<pallas_src>
import functools

import numpy as np

import jax
import jax.numpy as jnp
from jax.experimental import pallas as pl
from jax.experimental.pallas import tpu as pltpu


# The fixed 3x3 donut taps built in DonutMask.__init__ (n_dim=2), sum == 1.
_DONUT_2D = np.array([[0.5, 1.0, 0.5],
                      [1.0, 0.0, 1.0],
                      [0.5, 1.0, 0.5]], dtype=np.float64)
_DONUT_2D = _DONUT_2D / _DONUT_2D.sum()


def make_donut_weight(in_channels: int) -> jnp.ndarray:
    """The (C, C, 3, 3) buffer exactly as DonutMask.__init__ builds it (expand)."""
    w = np.broadcast_to(_DONUT_2D[None, None], (in_channels, in_channels, 3, 3))
    return jnp.asarray(np.ascontiguousarray(w), dtype=jnp.float32)


def _donut_kernel(x_ref, o_ref, pad_ref, *, nb, C, H, W, taps):
    # x_ref  : VMEM (nb, C, H, W)      input block (nb batch items)
    # o_ref  : VMEM (nb, C, H, W)      output block
    # pad_ref: VMEM (nb, H+2, W+2) f32 scratch: zero-padded channel-sum planes
    #
    # Rank-1 structure of the expanded donut weight:
    #   out[o, y, x] = sum_{i,dy,dx} k[dy,dx] * xpad[i, y+dy, x+dx]
    #                = sum_{dy,dx} k[dy,dx] * (sum_i xpad[i])[y+dy, x+dx]
    # so the result is identical for every output channel o.
    ch_sum = jnp.sum(x_ref[...].astype(jnp.float32), axis=1)       # (nb, H, W)

    # In-kernel padding=1 (replaces the host-side jnp.pad HBM round trip).
    # Zeroing the whole (tiny) scratch every step keeps it correct under
    # megacore splitting of the parallel batch axis.
    pad_ref[...] = jnp.zeros_like(pad_ref)
    pad_ref[:, 1:H + 1, 1:W + 1] = ch_sum

    # Single live accumulator; taps are compile-time constants, the zero
    # center tap is skipped entirely (8 FMAs per pixel total).
    acc = jnp.zeros((nb, H, W), jnp.float32)
    for t, w in enumerate(taps):
        if w == 0.0:
            continue
        dy, dx = divmod(t, 3)
        acc = acc + jnp.float32(w) * pad_ref[:, dy:dy + H, dx:dx + W]

    # Same plane for every output channel -> one broadcast store of the block.
    o_ref[...] = jnp.broadcast_to(acc[:, None], (nb, C, H, W)).astype(o_ref.dtype)


def donut_mask(x: jnp.ndarray, weight: jnp.ndarray = None, *, batch_block: int = 1):
    """x: (N, C, H, W); weight: (C, C, 3, 3) expanded DonutMask buffer (or None
    to use the canonical donut taps).  Returns conv2d(x, weight, padding=1)."""
    N, C, H, W = x.shape
    nb = batch_block
    assert N % nb == 0, (N, nb)

    if weight is None:
        taps = tuple(float(v) for v in _DONUT_2D.reshape(-1))
    else:
        # DonutMask expands one 3x3 kernel to every (o, i) pair, so the channel
        # contraction is rank-1.  Verify (weight is a fixed module buffer, so it
        # is concrete here) and take the taps from pair (0, 0).
        w_np = np.asarray(weight, dtype=np.float32)
        assert w_np.shape == (C, C, 3, 3), w_np.shape
        assert np.allclose(w_np, np.broadcast_to(w_np[0, 0], w_np.shape)), (
            "donut_mask requires the expanded (shared-tap) DonutMask weight")
        taps = tuple(float(v) for v in w_np[0, 0].reshape(-1))

    kernel = functools.partial(_donut_kernel, nb=nb, C=C, H=H, W=W, taps=taps)

    return pl.pallas_call(
        kernel,
        out_shape=jax.ShapeDtypeStruct((N, C, H, W), x.dtype),
        grid_spec=pltpu.PrefetchScalarGridSpec(
            num_scalar_prefetch=0,
            grid=(N // nb,),
            in_specs=[pl.BlockSpec((nb, C, H, W), lambda n: (n, 0, 0, 0))],
            out_specs=pl.BlockSpec((nb, C, H, W), lambda n: (n, 0, 0, 0)),
            scratch_shapes=[pltpu.VMEM((nb, H + 2, W + 2), jnp.float32)],
        ),
        compiler_params=pltpu.CompilerParams(
            dimension_semantics=("parallel",)),
    )(x)


if __name__ == "__main__":
    N, C, H, W = 2, 4, 16, 16
    key = jax.random.PRNGKey(0)
    x = jax.random.normal(key, (N, C, H, W), dtype=jnp.float32)
    weight = make_donut_weight(C)

    y = jax.block_until_ready(donut_mask(x, weight))

    # Reference: exact conv2d semantics (NCHW, OIHW, padding=1, stride=1).
    ref = jax.lax.conv_general_dilated(
        x, weight, window_strides=(1, 1), padding=((1, 1), (1, 1)),
        dimension_numbers=("NCHW", "OIHW", "NCHW"))

    assert y.shape == ref.shape, (y.shape, ref.shape)
    max_err = float(jnp.max(jnp.abs(y - ref)))
    assert jnp.allclose(y, ref, atol=1e-5, rtol=1e-5), max_err
    print("KERNEL_OK")
</pallas_src>

<mosaic_0001>
module attributes {stable_mosaic.version = 11 : i64} {
  func.func @_donut_kernel(%arg0: i32, %arg1: memref<1x4x16x16xf32, #tpu.memory_space<vmem>>, %arg2: memref<1x4x16x16xf32, #tpu.memory_space<vmem>>, %arg3: memref<1x18x18xf32, #tpu.memory_space<vmem>>) attributes {dimension_semantics = [#tpu.dimension_semantics<parallel>], iteration_bounds = array<i64: 2>, scalar_prefetch = 0 : i64, scratch_operands = 1 : i64, tpu.core_type = #tpu.core_type<tc>, window_params = [{transform_indices = @transform_0, window_bounds = array<i64: 1, 4, 16, 16>}, {transform_indices = @transform_1, window_bounds = array<i64: 1, 4, 16, 16>}]} {
    %c0 = arith.constant 0 : index
    %c0_0 = arith.constant 0 : index
    %c0_1 = arith.constant 0 : index
    %c0_2 = arith.constant 0 : index
    %0 = vector.load %arg1[%c0, %c0_0, %c0_1, %c0_2] : memref<1x4x16x16xf32, #tpu.memory_space<vmem>>, vector<1x4x16x16xf32>
    %cst = arith.constant dense<0.000000e+00> : vector<1x16x16xf32>
    %1 = vector.multi_reduction <add>, %0, %cst [1] : vector<1x4x16x16xf32> to vector<1x16x16xf32>
    %cst_3 = arith.constant 0.000000e+00 : f32
    %2 = vector.broadcast %cst_3 : f32 to vector<1x18x18xf32>
    %c0_4 = arith.constant 0 : index
    %c0_5 = arith.constant 0 : index
    %c0_6 = arith.constant 0 : index
    %3 = vector.load %arg3[%c0_4, %c0_5, %c0_6] : memref<1x18x18xf32, #tpu.memory_space<vmem>>, vector<1x18x18xf32>
    tpu.vector_store %arg3[%c0_4, %c0_5, %c0_6], %2 {strides = array<i32>} : memref<1x18x18xf32, #tpu.memory_space<vmem>>, vector<1x18x18xf32>,
    %c0_7 = arith.constant 0 : index
    %c1 = arith.constant 1 : index
    %c1_8 = arith.constant 1 : index
    %4 = vector.load %arg3[%c0_7, %c1, %c1_8] : memref<1x18x18xf32, #tpu.memory_space<vmem>>, vector<1x16x16xf32>
    tpu.vector_store %arg3[%c0_7, %c1, %c1_8], %1 {strides = array<i32>} : memref<1x18x18xf32, #tpu.memory_space<vmem>>, vector<1x16x16xf32>,
    %cst_9 = arith.constant 0.000000e+00 : f32
    %5 = vector.broadcast %cst_9 : f32 to vector<1x16x16xf32>
    %c0_10 = arith.constant 0 : index
    %c0_11 = arith.constant 0 : index
    %c0_12 = arith.constant 0 : index
    %6 = vector.load %arg3[%c0_10, %c0_11, %c0_12] : memref<1x18x18xf32, #tpu.memory_space<vmem>>, vector<1x16x16xf32>
    %cst_13 = arith.constant 0.0833333358 : f32
    %7 = vector.broadcast %cst_13 : f32 to vector<1x16x16xf32>
    %8 = arith.mulf %7, %6 : vector<1x16x16xf32>
    %9 = arith.addf %5, %8 : vector<1x16x16xf32>
    %c0_14 = arith.constant 0 : index
    %c0_15 = arith.constant 0 : index
    %c1_16 = arith.constant 1 : index
    %10 = vector.load %arg3[%c0_14, %c0_15, %c1_16] : memref<1x18x18xf32, #tpu.memory_space<vmem>>, vector<1x16x16xf32>
    %cst_17 = arith.constant 0.166666672 : f32
    %11 = vector.broadcast %cst_17 : f32 to vector<1x16x16xf32>
    %12 = arith.mulf %11, %10 : vector<1x16x16xf32>
    %13 = arith.addf %9, %12 : vector<1x16x16xf32>
    %c0_18 = arith.constant 0 : index
    %c0_19 = arith.constant 0 : index
    %c2 = arith.constant 2 : index
    %14 = vector.load %arg3[%c0_18, %c0_19, %c2] : memref<1x18x18xf32, #tpu.memory_space<vmem>>, vector<1x16x16xf32>
    %cst_20 = arith.constant 0.0833333358 : f32
    %15 = vector.broadcast %cst_20 : f32 to vector<1x16x16xf32>
    %16 = arith.mulf %15, %14 : vector<1x16x16xf32>
    %17 = arith.addf %13, %16 : vector<1x16x16xf32>
    %c0_21 = arith.constant 0 : index
    %c1_22 = arith.constant 1 : index
    %c0_23 = arith.constant 0 : index
    %18 = vector.load %arg3[%c0_21, %c1_22, %c0_23] : memref<1x18x18xf32, #tpu.memory_space<vmem>>, vector<1x16x16xf32>
    %cst_24 = arith.constant 0.166666672 : f32
    %19 = vector.broadcast %cst_24 : f32 to vector<1x16x16xf32>
    %20 = arith.mulf %19, %18 : vector<1x16x16xf32>
    %21 = arith.addf %17, %20 : vector<1x16x16xf32>
    %c0_25 = arith.constant 0 : index
    %c1_26 = arith.constant 1 : index
    %c2_27 = arith.constant 2 : index
    %22 = vector.load %arg3[%c0_25, %c1_26, %c2_27] : memref<1x18x18xf32, #tpu.memory_space<vmem>>, vector<1x16x16xf32>
    %cst_28 = arith.constant 0.166666672 : f32
    %23 = vector.broadcast %cst_28 : f32 to vector<1x16x16xf32>
    %24 = arith.mulf %23, %22 : vector<1x16x16xf32>
    %25 = arith.addf %21, %24 : vector<1x16x16xf32>
    %c0_29 = arith.constant 0 : index
    %c2_30 = arith.constant 2 : index
    %c0_31 = arith.constant 0 : index
    %26 = vector.load %arg3[%c0_29, %c2_30, %c0_31] : memref<1x18x18xf32, #tpu.memory_space<vmem>>, vector<1x16x16xf32>
    %cst_32 = arith.constant 0.0833333358 : f32
    %27 = vector.broadcast %cst_32 : f32 to vector<1x16x16xf32>
    %28 = arith.mulf %27, %26 : vector<1x16x16xf32>
    %29 = arith.addf %25, %28 : vector<1x16x16xf32>
    %c0_33 = arith.constant 0 : index
    %c2_34 = arith.constant 2 : index
    %c1_35 = arith.constant 1 : index
    %30 = vector.load %arg3[%c0_33, %c2_34, %c1_35] : memref<1x18x18xf32, #tpu.memory_space<vmem>>, vector<1x16x16xf32>
    %cst_36 = arith.constant 0.166666672 : f32
    %31 = vector.broadcast %cst_36 : f32 to vector<1x16x16xf32>
    %32 = arith.mulf %31, %30 : vector<1x16x16xf32>
    %33 = arith.addf %29, %32 : vector<1x16x16xf32>
    %c0_37 = arith.constant 0 : index
    %c2_38 = arith.constant 2 : index
    %c2_39 = arith.constant 2 : index
    %34 = vector.load %arg3[%c0_37, %c2_38, %c2_39] : memref<1x18x18xf32, #tpu.memory_space<vmem>>, vector<1x16x16xf32>
    %cst_40 = arith.constant 0.0833333358 : f32
    %35 = vector.broadcast %cst_40 : f32 to vector<1x16x16xf32>
    %36 = arith.mulf %35, %34 : vector<1x16x16xf32>
    %37 = arith.addf %33, %36 : vector<1x16x16xf32>
    %38 = vector.shape_cast %37 : vector<1x16x16xf32> to vector<1x1x16x16xf32>
    %39 = vector.shape_cast %38 : vector<1x1x16x16xf32> to vector<1x1x16x16xf32>
    %40 = vector.broadcast %39 : vector<1x1x16x16xf32> to vector<1x4x16x16xf32>
    %c0_41 = arith.constant 0 : index
    %c0_42 = arith.constant 0 : index
    %c0_43 = arith.constant 0 : index
    %c0_44 = arith.constant 0 : index
    %41 = vector.load %arg2[%c0_41, %c0_42, %c0_43, %c0_44] : memref<1x4x16x16xf32, #tpu.memory_space<vmem>>, vector<1x4x16x16xf32>
    tpu.vector_store %arg2[%c0_41, %c0_42, %c0_43, %c0_44], %40 {strides = array<i32>} : memref<1x4x16x16xf32, #tpu.memory_space<vmem>>, vector<1x4x16x16xf32>,
    return
  }
  func.func @transform_0(%arg0: i32) -> (i32, i32, i32, i32) {
    %c0_i32 = arith.constant 0 : i32
    %c0_i32_0 = arith.constant 0 : i32
    %c0_i32_1 = arith.constant 0 : i32
    %c0_i32_2 = arith.constant 0 : i32
    return %arg0, %c0_i32, %c0_i32_0, %c0_i32_1 : i32, i32, i32, i32
  }
  func.func @transform_1(%arg0: i32) -> (i32, i32, i32, i32) {
    %c0_i32 = arith.constant 0 : i32
    %c0_i32_0 = arith.constant 0 : i32
    %c0_i32_1 = arith.constant 0 : i32
    %c0_i32_2 = arith.constant 0 : i32
    return %arg0, %c0_i32, %c0_i32_0, %c0_i32_1 : i32, i32, i32, i32
  }
}

</mosaic_0001>

<llo_original>
// kernel: tpu_custom_call.1
$region0: #{tpu_custom_call.1}
  #allocation0 [shape = 'u32[]', space=smem, size = 0x4, offset = 0x4, fixed_abs, tag = 'smem constant byte address 0x4 - core index']
  #allocation1 [shape = 'u32[144,128]{1,0:T(1,128)}', space=vmem, size = 0x12000, scoped, tag = 'internal scratch']
  #allocation2 [shape = 'f32[1,18,18]{2,1,0:T(8,128)}', space=vmem, size = 0x3000, scoped, tag = 'scratch operand']
  %s0 = inlined_call_operand.hbm [shape: f32[2,4,16,16], index: 0, kind: input, shape index: {}]
  %s1 = inlined_call_operand.hbm [shape: f32[2,4,16,16], index: 1, kind: output, shape index: {}]
  %s2 = sld [smem:[#allocation0]]
  $region41: #{tpu_custom_call.1} parent=0
    _
  %s4 = ssub.s32 1, %s2
  %s5 = scalar_select 0, %s4, %s2
  $region1: #{tpu_custom_call.1} parent=0
    #allocation3 [shape = 'u8[65536]{0}', space=vmem, size = 0x10000, scoped, tag = 'input window, operand 0']
    #allocation4 [shape = 's32[2]{0}', space=sflag, size = 0x8, scoped, tag = 'scoped memory for tpu_custom_call.1']
    #allocation5 [shape = 's32[2]{0}', space=sflag, size = 0x8, scoped, tag = 'scoped memory for tpu_custom_call.1']
    #allocation6 [shape = 'u8[65536]{0}', space=vmem, size = 0x10000, scoped, tag = 'output window, operand 0']
    %6 = vsyncpa [#allocation4], 0
    %s7 = scalar_lea.sflag [#allocation4], 1
    %8 = vsyncpa %s7, 0
    %9 = vsyncpa [#allocation5], 0
    %s10 = scalar_lea.sflag [#allocation5], 1
    %11 = vsyncpa %s10, 0
    loop: start=0, step=1, limit=4
    $region2: #{tpu_custom_call.1} parent=1 // loop_pre_header
      _
    $region3: #{tpu_custom_call.1} parent=1 // loop_header
      %s13 = sphi 0, %s17
      %p14 = scmp.ge.s32.totalorder %s13, 4
      %s23 = sphi 0, %s25
      %s26 = sphi 0, %s23
      %s27 = sphi 0, %s26
      %s43 = sphi 0, %s27
      %s49 = sphi 0, %s51
      %s52 = sphi 0, %s49
      %s53 = sphi 0, %s52
      %s69 = sphi 0, %s53
    $region4: #{tpu_custom_call.1} parent=1 // loop_header_branch
      %16 = sbr.rel (%p14) target = $region8
    $region5: #{tpu_custom_call.1} parent=1 // loop_body
      %s18 = ssub.s32 %s13, 1
      %s19 = ssub.s32 %s13, 2
      %s20 = sadd.s32 %s13, 1
      %s21 = ssub.s32 %s13, %s20
      %p22 = scmp.eq.s32.totalorder %s21, 0
      %s24 = sadd.s32 %s23, 1
      %s25 = scalar_select %p22, %s23, %s24
      %p28 = pneg %p22
      %p29 = scmp.eq.s32.totalorder %s13, 1
      %p30 = por %p28, %p29
      %p31 = scmp.ne.s32.totalorder %s23, %s26
      %p32 = scmp.eq.s32.totalorder %s13, 0
      %p33 = por %p31, %p32
      %p34 = scmp.ne.s32.totalorder %s23, %s26
      %p35 = scmp.eq.s32.totalorder %s18, 1
      %p36 = por %p34, %p35
      %p37 = scmp.ne.s32.totalorder %s26, %s27
      %p38 = scmp.eq.s32.totalorder %s18, 0
      %p39 = por %p37, %p38
      %p40 = scmp.ne.s32.totalorder %s26, %s27
      %p41 = scmp.eq.s32.totalorder %s19, 1
      %p42 = por %p40, %p41
      %p44 = scmp.ne.s32.totalorder %s27, %s43
      %p45 = scmp.eq.s32.totalorder %s19, 0
      %p46 = por %p44, %p45
      %s47 = ssub.s32 %s13, %s20
      %p48 = scmp.eq.s32.totalorder %s47, 0
      %s50 = sadd.s32 %s49, 1
      %s51 = scalar_select %p48, %s49, %s50
      %p54 = pneg %p48
      %p55 = scmp.eq.s32.totalorder %s13, 1
      %p56 = por %p54, %p55
      %p57 = scmp.ne.s32.totalorder %s49, %s52
      %p58 = scmp.eq.s32.totalorder %s13, 0
      %p59 = por %p57, %p58
      %p60 = scmp.ne.s32.totalorder %s49, %s52
      %p61 = scmp.eq.s32.totalorder %s18, 1
      %p62 = por %p60, %p61
      %p63 = scmp.ne.s32.totalorder %s52, %s53
      %p64 = scmp.eq.s32.totalorder %s18, 0
      %p65 = por %p63, %p64
      %p66 = scmp.ne.s32.totalorder %s52, %s53
      %p67 = scmp.eq.s32.totalorder %s19, 1
      %p68 = por %p66, %p67
      %p70 = scmp.ne.s32.totalorder %s53, %s69
      %p71 = scmp.eq.s32.totalorder %s19, 0
      %p72 = por %p70, %p71
      %p73 = scmp.le.s32.totalorder 1, %s13
      %p74 = scmp.lt.s32.totalorder %s13, 3
      %p75 = pnand %p73, %p74
      %p76 = pneg %p75
      // Predicated region
      $region9: #{tpu_custom_call.1} parent=5 // pred_check
        _
      $region10: #{tpu_custom_call.1} parent=5 // pred_check_branch
        %78 = sbr.rel (%p75) target = $region12
      $region11: #{tpu_custom_call.1} parent=5 // pred_region
        %s79 = ssub.s32 %s13, 1
      $region12: #{tpu_custom_call.1} parent=5 // pred_fallthru
        _
      %p80 = scmp.lt.s32.totalorder %s13, 2
      // Predicated region
      $region13: #{tpu_custom_call.1} parent=5 // pred_check
        %p81 = pneg %p80
      $region14: #{tpu_custom_call.1} parent=5 // pred_check_branch
        %83 = sbr.rel (%p81) target = $region16
      $region15: #{tpu_custom_call.1} parent=5 // pred_region
        // Predicated region
        $region17: #{tpu_custom_call.1} parent=15 // pred_check
          %p84 = pneg %p33
        $region18: #{tpu_custom_call.1} parent=15 // pred_check_branch
          %86 = sbr.rel (%p84) target = $region20
        $region19: #{tpu_custom_call.1} parent=15 // pred_region
          %s87 = sand.u32 %s23, 1
          %s88 = scalar_lea.sflag [#allocation4], %s87
          %s89 = sand.u32 %s23, 1
          %s90 = smul.addr %s89, 64
          %s91 = scalar_lea.vmem [#allocation3], %s90
          %s93 = ssub.s32 1024, 1024
          %94 = vsyncadd %s88, %s93
          %s95 = smul.addr %s13, 8
          %s96 = smul.addr %s95, 128
          %s97 = scalar_lea.hbm %s0, %s96
          %s98 = sshll.u32 %s91, 4
          %s99 = int_to_ptr.vmem [resolvable:$true] %s98
          %104 = dma.hbm_to_vmem [thread:$0]  %s97, 1024, %s99, %s88, 128, 128, 8
        $region20: #{tpu_custom_call.1} parent=15 // pred_fallthru
          _
      $region16: #{tpu_custom_call.1} parent=5 // pred_fallthru
        _
      %p105 = scmp.le.s32.totalorder 1, %s13
      %p106 = scmp.lt.s32.totalorder %s13, 3
      %p107 = pnand %p105, %p106
      %p108 = pneg %p107
      // Predicated region
      $region21: #{tpu_custom_call.1} parent=5 // pred_check
        _
      $region22: #{tpu_custom_call.1} parent=5 // pred_check_branch
        %110 = sbr.rel (%p107) target = $region24
      $region23: #{tpu_custom_call.1} parent=5 // pred_region
        %s111 = ssub.s32 %s13, 1
        %s112 = sand.u32 %s26, 1
        %s113 = scalar_lea.sflag [#allocation4], %s112
        %s114 = sand.u32 %s26, 1
        %s115 = smul.addr %s114, 64
        %s116 = scalar_lea.vmem [#allocation3], %s115
        // Predicated region
        $region25: #{tpu_custom_call.1} parent=23 // pred_check
          %p117 = pneg %p39
        $region26: #{tpu_custom_call.1} parent=23 // pred_check_branch
          %119 = sbr.rel (%p117) target = $region28
        $region27: #{tpu_custom_call.1} parent=23 // pred_region
          %120 = dma.done %s113, 1024
        $region28: #{tpu_custom_call.1} parent=23 // pred_fallthru
          _
        %s121 = sand.u32 %s26, 1
        %s122 = scalar_lea.sflag [#allocation4], %s121
        %s123 = sand.u32 %s26, 1
        %s124 = smul.addr %s123, 64
        %s125 = scalar_lea.vmem [#allocation3], %s124
        %p126 = pneg %p39
        %p127 = pneg %p36
        %p128 = pneg %p65
        %p129 = pneg %p62
        %s130 = sand.u32 %s52, 1
        %s131 = scalar_lea.sflag [#allocation5], %s130
        %s132 = sand.u32 %s52, 1
        %s133 = smul.addr %s132, 64
        %s134 = scalar_lea.vmem [#allocation6], %s133
        %v135 = vld [vmem:[%s116] sm:$0xff]
        %v136 = vld [vmem:[%s116 + $0x8] sm:$0xff]
        %v137 = vld [vmem:[%s116 + $0x10] sm:$0xff]
        %v138 = vld [vmem:[%s116 + $0x18] sm:$0xff]
        %v139 = vld [vmem:[%s116 + $0x20] sm:$0xff]
        %v140 = vld [vmem:[%s116 + $0x28] sm:$0xff]
        %v141 = vld [vmem:[%s116 + $0x30] sm:$0xff]
        %v142 = vld [vmem:[%s116 + $0x38] sm:$0xff]
        %vm143 = vcmask 130048
        %v144 = vsel %vm143, %v135, 0.0
        %v145 = vsel %vm143, %v137, 0.0
        %v146 = vadd.f32 %v144, %v145
        %v147 = vsel %vm143, %v139, 0.0
        %v148 = vadd.f32 %v146, %v147
        %v149 = vsel %vm143, %v141, 0.0
        %v150 = vadd.f32 %v148, %v149
        %v151 = vsel %vm143, %v136, 0.0
        %v152 = vsel %vm143, %v138, 0.0
        %v153 = vadd.f32 %v151, %v152
        %v154 = vsel %vm143, %v140, 0.0
        %v155 = vadd.f32 %v153, %v154
        %v156 = vsel %vm143, %v142, 0.0
        %v157 = vadd.f32 %v155, %v156
        %vm158 = vcmask 146432
        %159 = vst.msk [vmem:[#allocation2] sm:$0xff] %vm158, 0.0
        %160 = vst.msk [vmem:[#allocation2 + $0x8] sm:$0xff] %vm158, 0.0
        %vm161 = vcmask 140288
        %162 = vst.msk [vmem:[#allocation2 + $0x10] sm:$0x3] %vm161, 0.0
        %165 = vrot.lane.b32.xlu0 %v150, 1
        %v166 = vpop.permute.xlu0 %165
        %167 = vrot.lane.b32.xlu0 %v157, 1
        %v168 = vpop.permute.xlu0 %167
        %vm171 = vcmask 138248
        %172 = vst.msk [vmem:[#allocation2 + $0x1] sm:$0xff] %vm171, %v166
        %173 = vst.msk [vmem:[#allocation2 + $0x9] sm:$0xff] %vm171, %v168
        %v174 = vld [vmem:[#allocation2] sm:$0xff]
        %v175 = vld [vmem:[#allocation2 + $0x8] sm:$0xff]
        %v176 = vmul.f32 %v174, 0.083333336
        %v177 = vmul.f32 %v175, 0.083333336
        %v178 = vadd.f32 %v176, 0.0
        %v179 = vadd.f32 %v177, 0.0
        %v180 = vmul.f32 %v174, 0.16666667
        %v181 = vmul.f32 %v175, 0.16666667
        %184 = vrot.lane.b32.xlu0 %v180, 127
        %v185 = vpop.permute.xlu0 %184
        %186 = vrot.lane.b32.xlu0 %v181, 127
        %v187 = vpop.permute.xlu0 %186
        %v190 = vadd.f32 %v178, %v185
        %v191 = vadd.f32 %v179, %v187
        %194 = vrot.lane.b32.xlu0 %v176, 126
        %v195 = vpop.permute.xlu0 %194
        %196 = vrot.lane.b32.xlu0 %v177, 126
        %v197 = vpop.permute.xlu0 %196
        %v200 = vadd.f32 %v190, %v195
        %v201 = vadd.f32 %v191, %v197
        %v202 = vld [vmem:[#allocation2 + $0x1] sm:$0xff]
        %v203 = vld [vmem:[#allocation2 + $0x9] sm:$0xff]
        %v204 = vmul.f32 %v202, 0.16666667
        %v205 = vmul.f32 %v203, 0.16666667
        %v206 = vadd.f32 %v200, %v204
        %v207 = vadd.f32 %v201, %v205
        %210 = vrot.lane.b32.xlu0 %v204, 126
        %v211 = vpop.permute.xlu0 %210
        %212 = vrot.lane.b32.xlu0 %v205, 126
        %v213 = vpop.permute.xlu0 %212
        %v216 = vadd.f32 %v206, %v211
        %v217 = vadd.f32 %v207, %v213
        %v218 = vld [vmem:[#allocation2 + $0x2] sm:$0xff]
        %v219 = vld [vmem:[#allocation2 + $0xa] sm:$0xff]
        %v220 = vmul.f32 %v218, 0.083333336
        %v221 = vmul.f32 %v219, 0.083333336
        %v222 = vadd.f32 %v216, %v220
        %v223 = vadd.f32 %v217, %v221
        %v224 = vmul.f32 %v218, 0.16666667
        %v225 = vmul.f32 %v219, 0.16666667
        %228 = vrot.lane.b32.xlu0 %v224, 127
        %v229 = vpop.permute.xlu0 %228
        %230 = vrot.lane.b32.xlu0 %v225, 127
        %v231 = vpop.permute.xlu0 %230
        %v234 = vadd.f32 %v222, %v229
        %v235 = vadd.f32 %v223, %v231
        %238 = vrot.lane.b32.xlu0 %v220, 126
        %v239 = vpop.permute.xlu0 %238
        %240 = vrot.lane.b32.xlu0 %v221, 126
        %v241 = vpop.permute.xlu0 %240
        %v244 = vadd.f32 %v234, %v239
        %v245 = vadd.f32 %v235, %v241
        %246 = vst.msk [vmem:[%s134] sm:$0xff] %vm143, %v244
        %247 = vst.msk [vmem:[%s134 + $0x8] sm:$0xff] %vm143, %v245
        %248 = vst.msk [vmem:[%s134 + $0x10] sm:$0xff] %vm143, %v244
        %249 = vst.msk [vmem:[%s134 + $0x18] sm:$0xff] %vm143, %v245
        %250 = vst.msk [vmem:[%s134 + $0x20] sm:$0xff] %vm143, %v244
        %251 = vst.msk [vmem:[%s134 + $0x28] sm:$0xff] %vm143, %v245
        %252 = vst.msk [vmem:[%s134 + $0x30] sm:$0xff] %vm143, %v244
        %253 = vst.msk [vmem:[%s134 + $0x38] sm:$0xff] %vm143, %v245
        %s254 = sand.u32 %s52, 1
        %s255 = scalar_lea.sflag [#allocation5], %s254
        %s256 = sand.u32 %s52, 1
        %s257 = smul.addr %s256, 64
        %s258 = scalar_lea.vmem [#allocation6], %s257
        // Predicated region
        $region29: #{tpu_custom_call.1} parent=23 // pred_check
          %p259 = pneg %p62
        $region30: #{tpu_custom_call.1} parent=23 // pred_check_branch
          %261 = sbr.rel (%p259) target = $region32
        $region31: #{tpu_custom_call.1} parent=23 // pred_region
          %s263 = ssub.s32 1024, 1024
          %264 = vsyncadd %s255, %s263
          %s265 = smul.addr %s18, 8
          %s266 = smul.addr %s265, 128
          %s267 = scalar_lea.hbm %s1, %s266
          %s268 = sshll.u32 %s258, 4
          %s269 = int_to_ptr.vmem [resolvable:$true] %s268
          %274 = dma.vmem_to_hbm [thread:$0]  %s269, 1024, %s267, %s255, 128, 128, 8
        $region32: #{tpu_custom_call.1} parent=23 // pred_fallthru
          _
      $region24: #{tpu_custom_call.1} parent=5 // pred_fallthru
        _
      %p275 = scmp.le.s32.totalorder 2, %s13
      // Predicated region
      $region33: #{tpu_custom_call.1} parent=5 // pred_check
        %p276 = pneg %p275
      $region34: #{tpu_custom_call.1} parent=5 // pred_check_branch
        %278 = sbr.rel (%p276) target = $region36
      $region35: #{tpu_custom_call.1} parent=5 // pred_region
        %s279 = ssub.s32 %s13, 2
        // Predicated region
        $region37: #{tpu_custom_call.1} parent=35 // pred_check
          %p280 = pneg %p68
        $region38: #{tpu_custom_call.1} parent=35 // pred_check_branch
          %282 = sbr.rel (%p280) target = $region40
        $region39: #{tpu_custom_call.1} parent=35 // pred_region
          %s283 = sand.u32 %s53, 1
          %s284 = scalar_lea.sflag [#allocation5], %s283
          %s285 = sand.u32 %s53, 1
          %s286 = smul.addr %s285, 64
          %s287 = scalar_lea.vmem [#allocation6], %s286
          %288 = dma.done %s284, 1024
        $region40: #{tpu_custom_call.1} parent=35 // pred_fallthru
          _
      $region36: #{tpu_custom_call.1} parent=5 // pred_fallthru
        _
    $region6: #{tpu_custom_call.1} parent=1 // loop_footer
      %s17 = sadd.s32 1, %s13
    $region7: #{tpu_custom_call.1} parent=1 // loop_footer_branch
      %12 = sbr.rel target = $region3
    $region8: #{tpu_custom_call.1} parent=1 // loop_exit
      _
    %289 = vsyncpa [#allocation4], 1
    %s290 = scalar_lea.sflag [#allocation4], 1
    %291 = vsyncpa %s290, 1
    %292 = vsyncpa [#allocation5], 1
    %s293 = scalar_lea.sflag [#allocation5], 1
    %294 = vsyncpa %s293, 1

</llo_original>
